<compile_context>
chip_gen: v6e
topology: v6e:2x2x1
jax: 0.10.0
libtpu: 0.0.40
codegen_flags: <defaults>
</compile_context>

<pallas_src>
import math

import jax
import jax.numpy as jnp
from jax import lax
from jax.experimental import pallas as pl
from jax.experimental.pallas import tpu as pltpu

LN_EPS = 1e-5


def _round_up(x, m):
    return ((x + m - 1) // m) * m


def _make_kernel(n_real):
    """Kernel factory; closes over the true (unpadded) feature count."""
    inv_n = 1.0 / float(n_real)
    inv_sqrt2 = 1.0 / math.sqrt(2.0)

    def kernel(x_ref, w_ref, b_ref, g_ref, bt_ref, o_ref, acc_ref):
        k = pl.program_id(1)

        @pl.when(k == 0)
        def _():
            acc_ref[...] = jnp.zeros_like(acc_ref)

        # Native-dtype MXU matmul with f32 accumulation in VMEM scratch.
        acc_ref[...] += jnp.dot(x_ref[...], w_ref[...],
                                preferred_element_type=jnp.float32)

        @pl.when(k == pl.num_programs(1) - 1)
        def _():
            y = acc_ref[...] + b_ref[...].astype(jnp.float32)

            # Exact (erf-based) GELU, matching F.gelu's default.
            y = 0.5 * y * (1.0 + lax.erf(y * inv_sqrt2))

            # LayerNorm over the true feature count.  Padded lanes are exactly
            # zero (zero weight columns, zero bias, GELU(0)=0), so full-lane
            # sums divided by n_real are correct.
            s1 = jnp.sum(y, axis=-1, keepdims=True)
            s2 = jnp.sum(y * y, axis=-1, keepdims=True)
            mean = s1 * inv_n
            var = s2 * inv_n - mean * mean
            y_hat = (y - mean) * lax.rsqrt(var + LN_EPS)

            out = (y_hat * g_ref[...].astype(jnp.float32)
                   + bt_ref[...].astype(jnp.float32))
            o_ref[...] = out.astype(o_ref.dtype)

    return kernel


def classification_forward(x, w, b, gamma, beta, *, row_tile=256, k_tile=512):
    """y = LayerNorm(GELU(x @ w + b)).  x: [..., K], w: [K, N] (= torch W.T)."""
    K = x.shape[-1]
    N = w.shape[-1]
    lead = x.shape[:-1]

    x2d = x.reshape(-1, K)
    m = x2d.shape[0]

    # --- row tiling (pad rows with zeros; sliced off at the end) ------------
    tm = min(row_tile, _round_up(max(m, 1), 8))
    m_pad = _round_up(m, tm)

    # --- K tiling: one full-K block if small, otherwise 128-aligned tiles ---
    if K <= k_tile:
        tk = K
        k_pad = K
    else:
        tk = k_tile          # multiple of 128
        k_pad = _round_up(K, tk)

    # --- lane-dense output: pad N to a multiple of 128 with zero params -----
    n_pad = _round_up(N, 128)

    x_p = jnp.pad(x2d, ((0, m_pad - m), (0, k_pad - K)))
    w_p = jnp.pad(w, ((0, k_pad - K), (0, n_pad - N)))
    b_p = jnp.pad(b.reshape(1, N), ((0, 0), (0, n_pad - N)))
    g_p = jnp.pad(gamma.reshape(1, N), ((0, 0), (0, n_pad - N)))
    bt_p = jnp.pad(beta.reshape(1, N), ((0, 0), (0, n_pad - N)))

    grid = (m_pad // tm, k_pad // tk)

    # --- VMEM budget (double-buffered tiles + f32 accumulator) --------------
    bx = x_p.dtype.itemsize
    bw = w_p.dtype.itemsize
    bo = x.dtype.itemsize
    vmem_bytes = (2 * tm * tk * bx          # x tiles (double-buffered)
                  + 2 * tk * n_pad * bw     # w tiles (double-buffered)
                  + tm * n_pad * 4          # f32 accumulator scratch
                  + 2 * tm * n_pad * bo     # output tiles
                  + 6 * n_pad * bw)         # bias / gamma / beta
    vmem_limit = min(max(2 * vmem_bytes + (2 << 20), 32 << 20), 100 << 20)

    cost = pl.CostEstimate(
        flops=2 * m_pad * k_pad * n_pad,
        transcendentals=2 * m_pad * n_pad,
        bytes_accessed=(x_p.size * bx + w_p.size * bw + m_pad * n_pad * bo),
    )

    out = pl.pallas_call(
        _make_kernel(N),
        out_shape=jax.ShapeDtypeStruct((m_pad, n_pad), x.dtype),
        grid_spec=pltpu.PrefetchScalarGridSpec(
            num_scalar_prefetch=0,
            grid=grid,
            in_specs=[
                pl.BlockSpec((tm, tk), lambda i, k: (i, k)),
                pl.BlockSpec((tk, n_pad), lambda i, k: (k, 0)),
                pl.BlockSpec((1, n_pad), lambda i, k: (0, 0)),
                pl.BlockSpec((1, n_pad), lambda i, k: (0, 0)),
                pl.BlockSpec((1, n_pad), lambda i, k: (0, 0)),
            ],
            out_specs=pl.BlockSpec((tm, n_pad), lambda i, k: (i, 0)),
            scratch_shapes=[pltpu.VMEM((tm, n_pad), jnp.float32)],
        ),
        compiler_params=pltpu.CompilerParams(
            dimension_semantics=("parallel", "arbitrary"),
            vmem_limit_bytes=int(vmem_limit),
        ),
        cost_estimate=cost,
    )(x_p, w_p, b_p, g_p, bt_p)

    return out[:m, :N].reshape(*lead, N)


def init_params(key, in_features, out_features):
    """Deterministic synthetic params (shapes match nn.Linear + nn.LayerNorm)."""
    k_w, k_b = jax.random.split(key)
    bound = 1.0 / math.sqrt(in_features)
    # Stored as [in, out]; equals PyTorch weight.T
    w = jax.random.uniform(k_w, (in_features, out_features), jnp.float32,
                           minval=-bound, maxval=bound)
    b = jax.random.uniform(k_b, (out_features,), jnp.float32,
                           minval=-bound, maxval=bound)
    gamma = jnp.ones((out_features,), jnp.float32)
    beta = jnp.zeros((out_features,), jnp.float32)
    return w, b, gamma, beta


def reference_forward(x, w, b, gamma, beta):
    """Pure-JAX reference for correctness check."""
    y = x @ w + b
    y = 0.5 * y * (1.0 + lax.erf(y / math.sqrt(2.0)))
    mean = jnp.mean(y, -1, keepdims=True)
    var = jnp.mean((y - mean) ** 2, -1, keepdims=True)
    return (y - mean) / jnp.sqrt(var + LN_EPS) * gamma + beta


if __name__ == "__main__":
    key = jax.random.PRNGKey(0)

    # Case 1: small shapes matching the module's forward (single K/row tile).
    k_x, k_p, key = jax.random.split(key, 3)
    batch, seq, in_features, out_features = 2, 8, 32, 64
    x = jax.random.normal(k_x, (batch, seq, in_features), jnp.float32)
    w, b, gamma, beta = init_params(k_p, in_features, out_features)

    out = classification_forward(x, w, b, gamma, beta)
    out = jax.block_until_ready(out)
    ref = reference_forward(x, w, b, gamma, beta)
    assert out.shape == (batch, seq, out_features)
    assert jnp.allclose(out, ref, atol=2e-4, rtol=2e-4), "mismatch vs reference (case 1)"

    # Case 2: exercises K-reduction grid, row padding and lane padding.
    k_x2, k_p2 = jax.random.split(key)
    x2 = jax.random.normal(k_x2, (3, 20, 160), jnp.float32)
    w2, b2, g2, bt2 = init_params(k_p2, 160, 96)
    out2 = classification_forward(x2, w2, b2, g2, bt2, row_tile=256, k_tile=128)
    out2 = jax.block_until_ready(out2)
    ref2 = reference_forward(x2, w2, b2, g2, bt2)
    assert out2.shape == (3, 20, 96)
    assert jnp.allclose(out2, ref2, atol=2e-4, rtol=2e-4), "mismatch vs reference (case 2)"

    print("KERNEL_OK")
</pallas_src>

<mosaic_0001>
module attributes {stable_mosaic.version = 11 : i64} {
  func.func @kernel(%arg0: i32, %arg1: i32, %arg2: memref<16x32xf32, #tpu.memory_space<vmem>>, %arg3: memref<32x128xf32, #tpu.memory_space<vmem>>, %arg4: memref<1x128xf32, #tpu.memory_space<vmem>>, %arg5: memref<1x128xf32, #tpu.memory_space<vmem>>, %arg6: memref<1x128xf32, #tpu.memory_space<vmem>>, %arg7: memref<16x128xf32, #tpu.memory_space<vmem>>, %arg8: memref<16x128xf32, #tpu.memory_space<vmem>>) attributes {dimension_semantics = [#tpu.dimension_semantics<parallel>, #tpu.dimension_semantics<arbitrary>], iteration_bounds = array<i64: 1, 1>, scalar_prefetch = 0 : i64, scratch_operands = 1 : i64, tpu.core_type = #tpu.core_type<tc>, window_params = [{transform_indices = @transform_0, window_bounds = array<i64: 16, 32>}, {transform_indices = @transform_1, window_bounds = array<i64: 32, 128>}, {pipeline_mode = #tpu.pipeline_mode<synchronous>, transform_indices = @transform_2, window_bounds = array<i64: 1, 128>}, {pipeline_mode = #tpu.pipeline_mode<synchronous>, transform_indices = @transform_3, window_bounds = array<i64: 1, 128>}, {pipeline_mode = #tpu.pipeline_mode<synchronous>, transform_indices = @transform_4, window_bounds = array<i64: 1, 128>}, {transform_indices = @transform_5, window_bounds = array<i64: 16, 128>}]} {
    %c0_i32 = arith.constant 0 : i32
    %0 = arith.cmpi eq, %arg1, %c0_i32 : i32
    %1 = arith.extui %0 : i1 to i32
    %c0_i32_0 = arith.constant 0 : i32
    %2 = arith.cmpi ne, %1, %c0_i32_0 : i32
    scf.if %2 {
      %cst_10 = arith.constant 0.000000e+00 : f32
      %12 = vector.broadcast %cst_10 : f32 to vector<16x128xf32>
      %c0_11 = arith.constant 0 : index
      %c0_12 = arith.constant 0 : index
      %13 = vector.load %arg8[%c0_11, %c0_12] : memref<16x128xf32, #tpu.memory_space<vmem>>, vector<16x128xf32>
      tpu.vector_store %arg8[%c0_11, %c0_12], %12 {strides = array<i32>} : memref<16x128xf32, #tpu.memory_space<vmem>>, vector<16x128xf32>,
    } else {
    }
    %c0 = arith.constant 0 : index
    %c0_1 = arith.constant 0 : index
    %3 = vector.load %arg8[%c0, %c0_1] : memref<16x128xf32, #tpu.memory_space<vmem>>, vector<16x128xf32>
    %c0_2 = arith.constant 0 : index
    %c0_3 = arith.constant 0 : index
    %4 = vector.load %arg2[%c0_2, %c0_3] : memref<16x32xf32, #tpu.memory_space<vmem>>, vector<16x32xf32>
    %c0_4 = arith.constant 0 : index
    %c0_5 = arith.constant 0 : index
    %5 = vector.load %arg3[%c0_4, %c0_5] : memref<32x128xf32, #tpu.memory_space<vmem>>, vector<32x128xf32>
    %cst = arith.constant dense<0.000000e+00> : vector<16x128xf32>
    %6 = tpu.matmul %4, %5, %cst {dimension_numbers = #tpu.dot_dimension_numbers<[1], [0], [0], [1], [0, 0, 1, 1], [], []>} : vector<16x32xf32>, vector<32x128xf32>, vector<16x128xf32> -> vector<16x128xf32>
    %7 = arith.addf %3, %6 : vector<16x128xf32>
    %c0_6 = arith.constant 0 : index
    %c0_7 = arith.constant 0 : index
    %8 = vector.load %arg8[%c0_6, %c0_7] : memref<16x128xf32, #tpu.memory_space<vmem>>, vector<16x128xf32>
    tpu.vector_store %arg8[%c0_6, %c0_7], %7 {strides = array<i32>} : memref<16x128xf32, #tpu.memory_space<vmem>>, vector<16x128xf32>,
    %c0_i32_8 = arith.constant 0 : i32
    %9 = arith.cmpi eq, %arg1, %c0_i32_8 : i32
    %10 = arith.extui %9 : i1 to i32
    %c0_i32_9 = arith.constant 0 : i32
    %11 = arith.cmpi ne, %10, %c0_i32_9 : i32
    scf.if %11 {
      %c0_10 = arith.constant 0 : index
      %c0_11 = arith.constant 0 : index
      %12 = vector.load %arg8[%c0_10, %c0_11] : memref<16x128xf32, #tpu.memory_space<vmem>>, vector<16x128xf32>
      %c0_12 = arith.constant 0 : index
      %c0_13 = arith.constant 0 : index
      %13 = vector.load %arg4[%c0_12, %c0_13] : memref<1x128xf32, #tpu.memory_space<vmem>>, vector<1x128xf32>
      %14 = vector.broadcast %13 : vector<1x128xf32> to vector<16x128xf32>
      %15 = arith.addf %12, %14 : vector<16x128xf32>
      %cst_14 = arith.constant 5.000000e-01 : f32
      %16 = vector.broadcast %cst_14 : f32 to vector<16x128xf32>
      %17 = arith.mulf %16, %15 : vector<16x128xf32>
      %cst_15 = arith.constant 0.707106769 : f32
      %18 = vector.broadcast %cst_15 : f32 to vector<16x128xf32>
      %19 = arith.mulf %15, %18 : vector<16x128xf32>
      %20 = math.erf %19 : vector<16x128xf32>
      %cst_16 = arith.constant 1.000000e+00 : f32
      %21 = vector.broadcast %cst_16 : f32 to vector<16x128xf32>
      %22 = arith.addf %21, %20 : vector<16x128xf32>
      %23 = arith.mulf %17, %22 : vector<16x128xf32>
      %cst_17 = arith.constant dense<0.000000e+00> : vector<16xf32>
      %24 = vector.multi_reduction <add>, %23, %cst_17 [1] : vector<16x128xf32> to vector<16xf32>
      %25 = vector.shape_cast %24 : vector<16xf32> to vector<16x1xf32>
      %26 = arith.mulf %23, %23 : vector<16x128xf32>
      %cst_18 = arith.constant dense<0.000000e+00> : vector<16xf32>
      %27 = vector.multi_reduction <add>, %26, %cst_18 [1] : vector<16x128xf32> to vector<16xf32>
      %28 = vector.shape_cast %27 : vector<16xf32> to vector<16x1xf32>
      %cst_19 = arith.constant 1.562500e-02 : f32
      %29 = vector.broadcast %cst_19 : f32 to vector<16x1xf32>
      %30 = arith.mulf %25, %29 : vector<16x1xf32>
      %cst_20 = arith.constant 1.562500e-02 : f32
      %31 = vector.broadcast %cst_20 : f32 to vector<16x1xf32>
      %32 = arith.mulf %28, %31 : vector<16x1xf32>
      %33 = arith.mulf %30, %30 : vector<16x1xf32>
      %34 = arith.subf %32, %33 : vector<16x1xf32>
      %35 = vector.broadcast %30 : vector<16x1xf32> to vector<16x128xf32>
      %36 = arith.subf %23, %35 : vector<16x128xf32>
      %cst_21 = arith.constant 9.99999974E-6 : f32
      %37 = vector.broadcast %cst_21 : f32 to vector<16x1xf32>
      %38 = arith.addf %34, %37 : vector<16x1xf32>
      %39 = math.rsqrt %38 : vector<16x1xf32>
      %40 = vector.broadcast %39 : vector<16x1xf32> to vector<16x128xf32>
      %41 = arith.mulf %36, %40 : vector<16x128xf32>
      %c0_22 = arith.constant 0 : index
      %c0_23 = arith.constant 0 : index
      %42 = vector.load %arg5[%c0_22, %c0_23] : memref<1x128xf32, #tpu.memory_space<vmem>>, vector<1x128xf32>
      %43 = vector.broadcast %42 : vector<1x128xf32> to vector<16x128xf32>
      %44 = arith.mulf %41, %43 : vector<16x128xf32>
      %c0_24 = arith.constant 0 : index
      %c0_25 = arith.constant 0 : index
      %45 = vector.load %arg6[%c0_24, %c0_25] : memref<1x128xf32, #tpu.memory_space<vmem>>, vector<1x128xf32>
      %46 = vector.broadcast %45 : vector<1x128xf32> to vector<16x128xf32>
      %47 = arith.addf %44, %46 : vector<16x128xf32>
      %c0_26 = arith.constant 0 : index
      %c0_27 = arith.constant 0 : index
      %48 = vector.load %arg7[%c0_26, %c0_27] : memref<16x128xf32, #tpu.memory_space<vmem>>, vector<16x128xf32>
      tpu.vector_store %arg7[%c0_26, %c0_27], %47 {strides = array<i32>} : memref<16x128xf32, #tpu.memory_space<vmem>>, vector<16x128xf32>,
    } else {
    }
    return
  }
  func.func @transform_0(%arg0: i32, %arg1: i32) -> (i32, i32) {
    %c0_i32 = arith.constant 0 : i32
    return %arg0, %arg1 : i32, i32
  }
  func.func @transform_1(%arg0: i32, %arg1: i32) -> (i32, i32) {
    %c0_i32 = arith.constant 0 : i32
    %c0_i32_0 = arith.constant 0 : i32
    return %arg1, %c0_i32 : i32, i32
  }
  func.func @transform_2(%arg0: i32, %arg1: i32) -> (i32, i32) {
    %c0_i32 = arith.constant 0 : i32
    %c0_i32_0 = arith.constant 0 : i32
    %c0_i32_1 = arith.constant 0 : i32
    return %c0_i32, %c0_i32_0 : i32, i32
  }
  func.func @transform_3(%arg0: i32, %arg1: i32) -> (i32, i32) {
    %c0_i32 = arith.constant 0 : i32
    %c0_i32_0 = arith.constant 0 : i32
    %c0_i32_1 = arith.constant 0 : i32
    return %c0_i32, %c0_i32_0 : i32, i32
  }
  func.func @transform_4(%arg0: i32, %arg1: i32) -> (i32, i32) {
    %c0_i32 = arith.constant 0 : i32
    %c0_i32_0 = arith.constant 0 : i32
    %c0_i32_1 = arith.constant 0 : i32
    return %c0_i32, %c0_i32_0 : i32, i32
  }
  func.func @transform_5(%arg0: i32, %arg1: i32) -> (i32, i32) {
    %c0_i32 = arith.constant 0 : i32
    %c0_i32_0 = arith.constant 0 : i32
    return %arg0, %c0_i32 : i32, i32
  }
}

</mosaic_0001>

<llo_original>
// kernel: tpu_custom_call.1
$region0: #{tpu_custom_call.1}
  #allocation0 [shape = 'u32[]', space=smem, size = 0x4, offset = 0x4, fixed_abs, tag = 'smem constant byte address 0x4 - core index']
  #allocation1 [shape = 'u32[144,128]{1,0:T(1,128)}', space=vmem, size = 0x12000, scoped, tag = 'internal scratch']
  #allocation2 [shape = 'f32[16,128]{1,0:T(8,128)}', space=vmem, size = 0x2000, scoped, tag = 'scratch operand']
  %s0 = inlined_call_operand.hbm [shape: f32[16,32], index: 0, kind: input, shape index: {}]
  %s1 = inlined_call_operand.hbm [shape: f32[32,128], index: 1, kind: input, shape index: {}]
  %s2 = inlined_call_operand.vmem [shape: f32[1,128], index: 2, kind: input, shape index: {}]
  %s3 = inlined_call_operand.vmem [shape: f32[1,128], index: 3, kind: input, shape index: {}]
  %s4 = inlined_call_operand.vmem [shape: f32[1,128], index: 4, kind: input, shape index: {}]
  %s5 = inlined_call_operand.hbm [shape: f32[16,128], index: 5, kind: output, shape index: {}]
  %s6 = sld [smem:[#allocation0]]
  $region46: #{tpu_custom_call.1} parent=0
    _
  %s8 = ssub.s32 1, %s6
  %s9 = scalar_select 0, %s8, %s6
  $region1: #{tpu_custom_call.1} parent=0
    #allocation3 [shape = 'u8[8192]{0}', space=vmem, size = 0x2000, scoped, tag = 'input window, operand 0, single buffered']
    #allocation4 [shape = 's32[1]{0}', space=sflag, size = 0x4, scoped, tag = 'scoped memory for tpu_custom_call.1']
    #allocation5 [shape = 's32[1]{0}', space=sflag, size = 0x4, scoped, tag = 'scoped memory for tpu_custom_call.1']
    #allocation6 [shape = 'u8[16384]{0}', space=vmem, size = 0x4000, scoped, tag = 'input window, operand 1, single buffered']
    #allocation7 [shape = 's32[1]{0}', space=sflag, size = 0x4, scoped, tag = 'scoped memory for tpu_custom_call.1']
    #allocation8 [shape = 'u8[8192]{0}', space=vmem, size = 0x2000, scoped, tag = 'output window, operand 0, single buffered']
    %10 = vsyncpa [#allocation4], 0
    %11 = vsyncpa [#allocation7], 0
    %12 = vsyncpa [#allocation5], 0
    // Predicated region
    $region2: #{tpu_custom_call.1} parent=1 // pred_check
      _
    $region3: #{tpu_custom_call.1} parent=1 // pred_check_branch
      %14 = sbr.rel (0) target = $region5
    $region4: #{tpu_custom_call.1} parent=1 // pred_region
      %s16 = ssub.s32 256, 256
      %17 = vsyncadd [#allocation4], %s16
      %s18 = sshll.u32 [#allocation3], 4
      %s19 = int_to_ptr.vmem [resolvable:$true] %s18
      %24 = dma.hbm_to_vmem [thread:$0]  %s0, 256, %s19, [#allocation4], 128, 128, 8
    $region5: #{tpu_custom_call.1} parent=1 // pred_fallthru
      _
    // Predicated region
    $region6: #{tpu_custom_call.1} parent=1 // pred_check
      _
    $region7: #{tpu_custom_call.1} parent=1 // pred_check_branch
      %26 = sbr.rel (0) target = $region9
    $region8: #{tpu_custom_call.1} parent=1 // pred_region
      %s28 = ssub.s32 512, 512
      %29 = vsyncadd [#allocation7], %s28
      %s30 = sshll.u32 [#allocation6], 4
      %s31 = int_to_ptr.vmem [resolvable:$true] %s30
      %36 = dma.hbm_to_vmem [thread:$0]  %s1, 512, %s31, [#allocation7], 128, 128, 8
    $region9: #{tpu_custom_call.1} parent=1 // pred_fallthru
      _
    // Predicated region
    $region10: #{tpu_custom_call.1} parent=1 // pred_check
      _
    $region11: #{tpu_custom_call.1} parent=1 // pred_check_branch
      %38 = sbr.rel (0) target = $region13
    $region12: #{tpu_custom_call.1} parent=1 // pred_region
      _
    $region13: #{tpu_custom_call.1} parent=1 // pred_fallthru
      _
    // Predicated region
    $region14: #{tpu_custom_call.1} parent=1 // pred_check
      _
    $region15: #{tpu_custom_call.1} parent=1 // pred_check_branch
      %40 = sbr.rel (0) target = $region17
    $region16: #{tpu_custom_call.1} parent=1 // pred_region
      _
    $region17: #{tpu_custom_call.1} parent=1 // pred_fallthru
      _
    // Predicated region
    $region18: #{tpu_custom_call.1} parent=1 // pred_check
      _
    $region19: #{tpu_custom_call.1} parent=1 // pred_check_branch
      %42 = sbr.rel (0) target = $region21
    $region20: #{tpu_custom_call.1} parent=1 // pred_region
      _
    $region21: #{tpu_custom_call.1} parent=1 // pred_fallthru
      _
    // Predicated region
    $region22: #{tpu_custom_call.1} parent=1 // pred_check
      _
    $region23: #{tpu_custom_call.1} parent=1 // pred_check_branch
      %44 = sbr.rel (0) target = $region25
    $region24: #{tpu_custom_call.1} parent=1 // pred_region
      %45 = dma.done [#allocation4], 256
    $region25: #{tpu_custom_call.1} parent=1 // pred_fallthru
      _
    // Predicated region
    $region26: #{tpu_custom_call.1} parent=1 // pred_check
      _
    $region27: #{tpu_custom_call.1} parent=1 // pred_check_branch
      %47 = sbr.rel (0) target = $region29
    $region28: #{tpu_custom_call.1} parent=1 // pred_region
      %48 = dma.done [#allocation7], 512
    $region29: #{tpu_custom_call.1} parent=1 // pred_fallthru
      _
    %p49 = scmp.eq.s32.totalorder 0, 0
    // Predicated region
    $region30: #{tpu_custom_call.1} parent=1 // pred_check
      %p50 = pneg %p49
    $region31: #{tpu_custom_call.1} parent=1 // pred_check_branch
      %52 = sbr.rel (%p50) target = $region33
    $region32: #{tpu_custom_call.1} parent=1 // pred_region
      %53 = vst [vmem:[#allocation2] sm:$0xff] 0.0
      %54 = vst [vmem:[#allocation2 + $0x8] sm:$0xff] 0.0
    $region33: #{tpu_custom_call.1} parent=1 // pred_fallthru
      _
    %v55 = vld [vmem:[#allocation2] sm:$0xff]
    %v56 = vld [vmem:[#allocation2 + $0x8] sm:$0xff]
    %v57 = vld [vmem:[#allocation3] sm:$0xff]
    %v58 = vld [vmem:[#allocation3 + $0x8] sm:$0xff]
    %v59 = vld [vmem:[#allocation6] sm:$0xff]
    %v60 = vld [vmem:[#allocation6 + $0x8] sm:$0xff]
    %v61 = vld [vmem:[#allocation6 + $0x10] sm:$0xff]
    %v62 = vld [vmem:[#allocation6 + $0x18] sm:$0xff]
    %vm63 = vcmask 261120
    %v65 = vsel %vm63, %v57, 0
    %v68 = vsel %vm63, %v58, 0
    %70 = vmatprep.subr.mxu0 0.0
    %71 = vmatpush1.msra.mxu0 0.0
    %72 = vmatprep.subr.mxu0 0.0
    %73 = vmatpush1.msra.mxu0 0.0
    %74 = vmatprep.subr.mxu0 0.0
    %75 = vmatpush1.msra.mxu0 0.0
    %76 = vmatprep.subr.mxu0 0.0
    %77 = vmatpush1.msra.mxu0 0.0
    %78 = vmatprep.subr.mxu0 0.0
    %79 = vmatpush1.msra.mxu0 0.0
    %80 = vmatprep.subr.mxu0 0.0
    %81 = vmatpush1.msra.mxu0 0.0
    %82 = vmatprep.subr.mxu0 0.0
    %83 = vmatpush1.msra.mxu0 0.0
    %84 = vmatprep.subr.mxu0 0.0
    %85 = vmatpush1.msra.mxu0 0.0
    %86 = vmatprep.subr.mxu0 0.0
    %87 = vmatpush1.msra.mxu0 0.0
    %88 = vmatprep.subr.mxu0 0.0
    %89 = vmatpush1.msra.mxu0 0.0
    %90 = vmatprep.subr.mxu0 0.0
    %91 = vmatpush1.msra.mxu0 0.0
    %92 = vmatprep.subr.mxu0 0.0
    %93 = vmatpush1.msra.mxu0 0.0
    %94 = vmatprep.subr.mxu0 0.0
    %95 = vmatpush1.msra.mxu0 %v62
    %96 = vmatprep.subr.mxu0 0.0
    %97 = vmatpush1.msra.mxu0 %v61
    %98 = vmatprep.subr.mxu0 0.0
    %99 = vmatpush1.msra.mxu0 %v60
    %100 = vmatprep.subr.mxu0 0.0
    %101 = vmatpush1.msra.mxu0 %v59
    %102 = vmatprep.subr.mxu0 0.0
    %103 = vmatpush2.msra.mxu0 0.0
    %104 = vmatprep.subr.mxu0 0.0
    %105 = vmatpush2.msra.mxu0 0.0
    %106 = vmatprep.subr.mxu0 0.0
    %107 = vmatpush2.msra.mxu0 0.0
    %108 = vmatprep.subr.mxu0 0.0
    %109 = vmatpush2.msra.mxu0 0.0
    %110 = vmatprep.subr.mxu0 0.0
    %111 = vmatpush2.msra.mxu0 0.0
    %112 = vmatprep.subr.mxu0 0.0
    %113 = vmatpush2.msra.mxu0 0.0
    %114 = vmatprep.subr.mxu0 0.0
    %115 = vmatpush2.msra.mxu0 0.0
    %116 = vmatprep.subr.mxu0 0.0
    %117 = vmatpush2.msra.mxu0 0.0
    %118 = vmatprep.subr.mxu0 0.0
    %119 = vmatpush2.msra.mxu0 0.0
    %120 = vmatprep.subr.mxu0 0.0
    %121 = vmatpush2.msra.mxu0 0.0
    %122 = vmatprep.subr.mxu0 0.0
    %123 = vmatpush2.msra.mxu0 0.0
    %124 = vmatprep.subr.mxu0 0.0
    %125 = vmatpush2.msra.mxu0 0.0
    %126 = vmatprep.subr.mxu0 0.0
    %127 = vmatpush2.msra.mxu0 0.0
    %128 = vmatprep.subr.mxu0 0.0
    %129 = vmatpush2.msra.mxu0 0.0
    %130 = vmatprep.subr.mxu0 0.0
    %131 = vmatpush2.msra.mxu0 0.0
    %132 = vmatprep.subr.mxu0 0.0
    %133 = vmatpush2.msra.mxu0 0.0
    %134 = vmatprep.mubr.f32.mxu0 0.0
    %135 = vmatmul.mubr.f32.gmra.mxu0 %v65
    %v136 = vpop.f32.mrf.mxu0
    %v137 = vadd.f32 0.0, %v136
    %v138 = vpop.f32.mrf.mxu0
    %139 = vmatprep.mubr.f32.mxu0 0.0
    %140 = vmatmul.mubr.f32.gmra.mxu0 %v68
    %v141 = vpop.f32.mrf.mxu0
    %v142 = vadd.f32 0.0, %v141
    %v143 = vpop.f32.mrf.mxu0
    %144 = vdwg.mxu0
    %v145 = vadd.f32 %v55, %v137
    %v146 = vadd.f32 %v56, %v142
    %147 = vst [vmem:[#allocation2] sm:$0xff] %v145
    %148 = vst [vmem:[#allocation2 + $0x8] sm:$0xff] %v146
    // Predicated region
    $region34: #{tpu_custom_call.1} parent=1 // pred_check
      %p149 = pneg %p49
    $region35: #{tpu_custom_call.1} parent=1 // pred_check_branch
      %151 = sbr.rel (%p149) target = $region37
    $region36: #{tpu_custom_call.1} parent=1 // pred_region
      %v152 = vld [vmem:[#allocation2] sm:$0xff]
      %v153 = vld [vmem:[#allocation2 + $0x8] sm:$0xff]
      %v154 = vld [vmem:[%s2] sm:$0x1]
      %v156 = vlaneseq
      %v157 = vshrl.u32 %v156, 7
      %v158 = vsub.s32 0, %v157
      %v159 = vrot.slane %v154, %v158
      %v161 = vadd.f32 %v152, %v159
      %v162 = vadd.f32 %v153, %v159
      %v163 = vmul.f32 %v161, 0.5
      %v164 = vmul.f32 %v162, 0.5
      %v165 = vmul.f32 %v161, 0.70710677
      %v166 = vmul.f32 %v162, 0.70710677
      %v167 = verf.f32.pop %v165
      %v168 = verf.f32.pop %v166
      %v169 = vadd.f32 %v167, 1.0
      %v170 = vadd.f32 %v168, 1.0
      %v171 = vmul.f32 %v163, %v169
      %v172 = vmul.f32 %v164, %v170
      %173 = vadd.xlane.f32.xlu0 %v171
      %v174 = vpop.xlane.xlu0 %173
      %175 = vadd.xlane.f32.xlu0 %v172
      %v176 = vpop.xlane.xlu0 %175
      %v177 = vmul.f32 %v171, %v171
      %v178 = vmul.f32 %v172, %v172
      %179 = vadd.xlane.f32.xlu0 %v177
      %v180 = vpop.xlane.xlu0 %179
      %181 = vadd.xlane.f32.xlu0 %v178
      %v182 = vpop.xlane.xlu0 %181
      %v183 = vmul.f32 %v174, 0.015625
      %v184 = vmul.f32 %v176, 0.015625
      %v185 = vmul.f32 %v180, 0.015625
      %v186 = vmul.f32 %v182, 0.015625
      %v187 = vmul.f32 %v183, %v183
      %v188 = vmul.f32 %v184, %v184
      %v189 = vsub.f32 %v185, %v187
      %v190 = vsub.f32 %v186, %v188
      %v191 = vsub.f32 %v171, %v183
      %v192 = vsub.f32 %v172, %v184
      %v193 = vadd.f32 %v189, 1e-05
      %v194 = vadd.f32 %v190, 1e-05
      %v195 = vrsqrt.pop %v193
      %v196 = vrsqrt.pop %v194
      %v197 = vmul.f32 %v191, %v195
      %v198 = vmul.f32 %v192, %v196
      %v199 = vld [vmem:[%s3] sm:$0x1]
      %v201 = vlaneseq
      %v202 = vshrl.u32 %v201, 7
      %v203 = vsub.s32 0, %v202
      %v204 = vrot.slane %v199, %v203
      %v206 = vmul.f32 %v197, %v204
      %v207 = vmul.f32 %v198, %v204
      %v208 = vld [vmem:[%s4] sm:$0x1]
      %v210 = vlaneseq
      %v211 = vshrl.u32 %v210, 7
      %v212 = vsub.s32 0, %v211
      %v213 = vrot.slane %v208, %v212
      %v215 = vadd.f32 %v206, %v213
      %v216 = vadd.f32 %v207, %v213
      %217 = vst [vmem:[#allocation8] sm:$0xff] %v215
      %218 = vst [vmem:[#allocation8 + $0x8] sm:$0xff] %v216
    $region37: #{tpu_custom_call.1} parent=1 // pred_fallthru
      _
    // Predicated region
    $region38: #{tpu_custom_call.1} parent=1 // pred_check
      _
    $region39: #{tpu_custom_call.1} parent=1 // pred_check_branch
      %220 = sbr.rel (0) target = $region41
    $region40: #{tpu_custom_call.1} parent=1 // pred_region
      %s222 = ssub.s32 256, 256
      %223 = vsyncadd [#allocation5], %s222
      %s224 = sshll.u32 [#allocation8], 4
      %s225 = int_to_ptr.vmem [resolvable:$true] %s224
      %230 = dma.vmem_to_hbm [thread:$0]  %s225, 256, %s5, [#allocation5], 128, 128, 8
    $region41: #{tpu_custom_call.1} parent=1 // pred_fallthru
      _
    // Predicated region
    $region42: #{tpu_custom_call.1} parent=1 // pred_check
      _
    $region43: #{tpu_custom_call.1} parent=1 // pred_check_branch
      %232 = sbr.rel (0) target = $region45
    $region44: #{tpu_custom_call.1} parent=1 // pred_region
      %233 = dma.done [#allocation5], 256
    $region45: #{tpu_custom_call.1} parent=1 // pred_fallthru
      _
    %234 = vsyncpa [#allocation4], 1
    %235 = vsyncpa [#allocation7], 1
    %236 = vsyncpa [#allocation5], 1

</llo_original>
